<compile_context>
chip_gen: v5e
topology: v5e:2x2
jax: 0.10.0
libtpu: 0.0.40
codegen_flags: <defaults>
</compile_context>

<pallas_src>
import jax
import jax.numpy as jnp
from jax.experimental import pallas as pl
from jax.experimental.pallas import tpu as pltpu

BN_EPS = 1e-5
LANE = 128      # feature axis padded to a multiple of the lane width
SUBLANE = 8     # packed-parameter array uses a full sublane tile

# Rows of the packed (8, Dp) BN-parameter array.
ROW_G1, ROW_BE1, ROW_G2, ROW_BE2 = 0, 1, 2, 3


def _text_feature_kernel(x_ref, w1_ref, w2_ref, p_ref, o_ref):
    """out = relu(BN2(relu(BN1(x@W1)) @ W2)) + x, single VMEM-resident block.

    Training-mode BatchNorm1d uses per-batch (biased) statistics, so the
    Linear bias cancels exactly:
        BN(x@W + b) = ((x@W + b) - (mean(x@W) + b)) * rsqrt(var(x@W)) * g + beta
                    = (x@W - mean(x@W)) * rsqrt(var(x@W)) * g + beta
    hence no bias terms appear below.
    """
    x = x_ref[...]                       # (B, Dp) f32
    p = p_ref[...]                       # (8, Dp) packed BN params
    g1, be1 = p[ROW_G1:ROW_G1 + 1, :], p[ROW_BE1:ROW_BE1 + 1, :]
    g2, be2 = p[ROW_G2:ROW_G2 + 1, :], p[ROW_BE2:ROW_BE2 + 1, :]

    # ---- linear1 -> BN1 (batch stats, fused scale/shift) -> relu ----
    h = jnp.dot(x.astype(w1_ref.dtype), w1_ref[...],
                preferred_element_type=jnp.float32)
    mean1 = jnp.mean(h, axis=0, keepdims=True)
    hc1 = h - mean1                                     # centered once, reused
    var1 = jnp.mean(hc1 * hc1, axis=0, keepdims=True)   # biased variance (PyTorch)
    scale1 = g1 * jax.lax.rsqrt(var1 + BN_EPS)          # cheap (1, Dp) math / EUP
    h1 = jnp.maximum(hc1 * scale1 + be1, 0.0)           # one fused mul-add + relu

    # ---- linear2 -> BN2 -> relu ----
    h = jnp.dot(h1.astype(w2_ref.dtype), w2_ref[...],
                preferred_element_type=jnp.float32)
    mean2 = jnp.mean(h, axis=0, keepdims=True)
    hc2 = h - mean2
    var2 = jnp.mean(hc2 * hc2, axis=0, keepdims=True)
    scale2 = g2 * jax.lax.rsqrt(var2 + BN_EPS)
    h2 = jnp.maximum(hc2 * scale2 + be2, 0.0)

    # ---- residual ----
    o_ref[...] = (h2 + x).astype(o_ref.dtype)


def text_feature_processing(x, params, *, matmul_dtype=None):
    """x: (B, D) float32.  params: dict w1, b1, g1, be1, w2, b2, g2, be2.

    w1/w2 stored as (in, out) = transpose of PyTorch's (out, in) weight.
    b1/b2 are accepted for interface parity but are mathematically inert under
    training-mode BatchNorm (they cancel exactly), so they are not shipped to
    the kernel.  Set matmul_dtype=jnp.bfloat16 on v6e/v7x for realistic D
    (native MXU dtype, half the weight DMA bytes); accumulation stays f32.
    """
    B, D = x.shape
    Dp = ((D + LANE - 1) // LANE) * LANE
    padD = Dp - D

    # Lane-dense feature axis.  Zero columns in weights / gamma / beta keep the
    # padded features identically zero; BN statistics are per-feature so the
    # real columns are unaffected.
    xp = jnp.pad(x, ((0, 0), (0, padD)))
    w1p = jnp.pad(params["w1"], ((0, padD), (0, padD)))
    w2p = jnp.pad(params["w2"], ((0, padD), (0, padD)))
    if matmul_dtype is not None:
        w1p = w1p.astype(matmul_dtype)
        w2p = w2p.astype(matmul_dtype)

    packed = jnp.zeros((SUBLANE, Dp), jnp.float32)
    packed = packed.at[ROW_G1, :D].set(params["g1"].reshape(-1))
    packed = packed.at[ROW_BE1, :D].set(params["be1"].reshape(-1))
    packed = packed.at[ROW_G2, :D].set(params["g2"].reshape(-1))
    packed = packed.at[ROW_BE2, :D].set(params["be2"].reshape(-1))

    vmem = pl.BlockSpec(memory_space=pltpu.MemorySpace.VMEM)
    out_padded = pl.pallas_call(
        _text_feature_kernel,
        out_shape=jax.ShapeDtypeStruct((B, Dp), x.dtype),
        in_specs=[vmem, vmem, vmem, vmem],
        out_specs=vmem,
    )(xp, w1p, w2p, packed)

    # TODO(synk): PyTorch BatchNorm1d also updates running_mean/running_var in
    # training mode; that buffer side effect is not reproduced (forward output
    # does not depend on it).
    # TODO(synk): for large B with realistic D (512-1024+), move to a
    # batch-tiled grid with two-pass BN (accumulate per-feature sum /
    # sum-of-squares in VMEM scratch, finalize under pl.when on the last tile)
    # so VMEM stays bounded on v7x (64 MiB) and HBM pipelining engages.
    if padD:
        out_padded = out_padded[:, :D]
    return out_padded


def _reference(x, p):
    """Pure-JAX reference mirroring the PyTorch forward (training-mode BN),
    including the Linear biases (which the kernel elides by exact algebra)."""
    def bn(h, g, b):
        m = jnp.mean(h, axis=0, keepdims=True)
        v = jnp.mean((h - m) ** 2, axis=0, keepdims=True)
        return (h - m) / jnp.sqrt(v + BN_EPS) * g + b

    h1 = jax.nn.relu(bn(x @ p["w1"] + p["b1"], p["g1"], p["be1"]))
    h2 = jax.nn.relu(bn(h1 @ p["w2"] + p["b2"], p["g2"], p["be2"]))
    return h2 + x


if __name__ == "__main__":
    # Residual connection requires input_dim == output_dim.
    B, D = 8, 32

    key = jax.random.PRNGKey(0)
    kx, kw1, kb1, kw2, kb2, kg1, kbe1, kg2, kbe2 = jax.random.split(key, 9)

    bound = 1.0 / jnp.sqrt(D)
    params = {
        # stored as (in, out) = transpose of PyTorch's (out, in) weight
        "w1": jax.random.uniform(kw1, (D, D), jnp.float32, -bound, bound),
        "b1": jax.random.uniform(kb1, (1, D), jnp.float32, -bound, bound),
        "w2": jax.random.uniform(kw2, (D, D), jnp.float32, -bound, bound),
        "b2": jax.random.uniform(kb2, (1, D), jnp.float32, -bound, bound),
        # BatchNorm affine params (perturbed away from the 1/0 defaults so the
        # scale/shift paths are exercised).
        "g1": 1.0 + 0.1 * jax.random.normal(kg1, (1, D), jnp.float32),
        "be1": 0.1 * jax.random.normal(kbe1, (1, D), jnp.float32),
        "g2": 1.0 + 0.1 * jax.random.normal(kg2, (1, D), jnp.float32),
        "be2": 0.1 * jax.random.normal(kbe2, (1, D), jnp.float32),
    }

    x = jax.random.normal(kx, (B, D), jnp.float32)

    out = text_feature_processing(x, params)
    out = jax.block_until_ready(out)

    ref = _reference(x, params)
    assert out.shape == (B, D)
    assert jnp.allclose(out, ref, atol=1e-4, rtol=1e-4), "mismatch vs reference"

    print("KERNEL_OK")
</pallas_src>

<mosaic_0001>
module attributes {stable_mosaic.version = 11 : i64} {
  func.func @_text_feature_kernel(%arg0: memref<8x128xf32, #tpu.memory_space<vmem>>, %arg1: memref<128x128xf32, #tpu.memory_space<vmem>>, %arg2: memref<128x128xf32, #tpu.memory_space<vmem>>, %arg3: memref<8x128xf32, #tpu.memory_space<vmem>>, %arg4: memref<8x128xf32, #tpu.memory_space<vmem>>) attributes {dimension_semantics = [], scalar_prefetch = 0 : i64, scratch_operands = 0 : i64, tpu.core_type = #tpu.core_type<tc>} {
    %c0 = arith.constant 0 : index
    %c0_0 = arith.constant 0 : index
    %0 = vector.load %arg0[%c0, %c0_0] : memref<8x128xf32, #tpu.memory_space<vmem>>, vector<8x128xf32>
    %c0_1 = arith.constant 0 : index
    %c0_2 = arith.constant 0 : index
    %1 = vector.load %arg3[%c0_1, %c0_2] : memref<8x128xf32, #tpu.memory_space<vmem>>, vector<8x128xf32>
    %2 = vector.extract_strided_slice %1 {offsets = [0, 0], sizes = [1, 128], strides = [1, 1]} : vector<8x128xf32> to vector<1x128xf32>
    %3 = vector.extract_strided_slice %1 {offsets = [1, 0], sizes = [1, 128], strides = [1, 1]} : vector<8x128xf32> to vector<1x128xf32>
    %4 = vector.extract_strided_slice %1 {offsets = [2, 0], sizes = [1, 128], strides = [1, 1]} : vector<8x128xf32> to vector<1x128xf32>
    %5 = vector.extract_strided_slice %1 {offsets = [3, 0], sizes = [1, 128], strides = [1, 1]} : vector<8x128xf32> to vector<1x128xf32>
    %c0_3 = arith.constant 0 : index
    %c0_4 = arith.constant 0 : index
    %6 = vector.load %arg1[%c0_3, %c0_4] : memref<128x128xf32, #tpu.memory_space<vmem>>, vector<128x128xf32>
    %cst = arith.constant dense<0.000000e+00> : vector<8x128xf32>
    %7 = tpu.matmul %0, %6, %cst {dimension_numbers = #tpu.dot_dimension_numbers<[1], [0], [0], [1], [0, 0, 1, 1], [], []>} : vector<8x128xf32>, vector<128x128xf32>, vector<8x128xf32> -> vector<8x128xf32>
    %cst_5 = arith.constant dense<0.000000e+00> : vector<128xf32>
    %8 = vector.multi_reduction <add>, %7, %cst_5 [0] : vector<8x128xf32> to vector<128xf32>
    %9 = vector.shape_cast %8 : vector<128xf32> to vector<1x128xf32>
    %cst_6 = arith.constant 8.000000e+00 : f32
    %10 = vector.broadcast %cst_6 : f32 to vector<1x128xf32>
    %11 = arith.divf %9, %10 : vector<1x128xf32>
    %12 = vector.broadcast %11 : vector<1x128xf32> to vector<8x128xf32>
    %13 = arith.subf %7, %12 : vector<8x128xf32>
    %14 = arith.mulf %13, %13 : vector<8x128xf32>
    %cst_7 = arith.constant dense<0.000000e+00> : vector<128xf32>
    %15 = vector.multi_reduction <add>, %14, %cst_7 [0] : vector<8x128xf32> to vector<128xf32>
    %16 = vector.shape_cast %15 : vector<128xf32> to vector<1x128xf32>
    %cst_8 = arith.constant 8.000000e+00 : f32
    %17 = vector.broadcast %cst_8 : f32 to vector<1x128xf32>
    %18 = arith.divf %16, %17 : vector<1x128xf32>
    %cst_9 = arith.constant 9.99999974E-6 : f32
    %19 = vector.broadcast %cst_9 : f32 to vector<1x128xf32>
    %20 = arith.addf %18, %19 : vector<1x128xf32>
    %21 = math.rsqrt %20 : vector<1x128xf32>
    %22 = arith.mulf %2, %21 : vector<1x128xf32>
    %23 = vector.broadcast %22 : vector<1x128xf32> to vector<8x128xf32>
    %24 = arith.mulf %13, %23 : vector<8x128xf32>
    %25 = vector.broadcast %3 : vector<1x128xf32> to vector<8x128xf32>
    %26 = arith.addf %24, %25 : vector<8x128xf32>
    %cst_10 = arith.constant 0.000000e+00 : f32
    %27 = vector.broadcast %cst_10 : f32 to vector<8x128xf32>
    %28 = arith.maximumf %26, %27 : vector<8x128xf32>
    %c0_11 = arith.constant 0 : index
    %c0_12 = arith.constant 0 : index
    %29 = vector.load %arg2[%c0_11, %c0_12] : memref<128x128xf32, #tpu.memory_space<vmem>>, vector<128x128xf32>
    %cst_13 = arith.constant dense<0.000000e+00> : vector<8x128xf32>
    %30 = tpu.matmul %28, %29, %cst_13 {dimension_numbers = #tpu.dot_dimension_numbers<[1], [0], [0], [1], [0, 0, 1, 1], [], []>} : vector<8x128xf32>, vector<128x128xf32>, vector<8x128xf32> -> vector<8x128xf32>
    %cst_14 = arith.constant dense<0.000000e+00> : vector<128xf32>
    %31 = vector.multi_reduction <add>, %30, %cst_14 [0] : vector<8x128xf32> to vector<128xf32>
    %32 = vector.shape_cast %31 : vector<128xf32> to vector<1x128xf32>
    %cst_15 = arith.constant 8.000000e+00 : f32
    %33 = vector.broadcast %cst_15 : f32 to vector<1x128xf32>
    %34 = arith.divf %32, %33 : vector<1x128xf32>
    %35 = vector.broadcast %34 : vector<1x128xf32> to vector<8x128xf32>
    %36 = arith.subf %30, %35 : vector<8x128xf32>
    %37 = arith.mulf %36, %36 : vector<8x128xf32>
    %cst_16 = arith.constant dense<0.000000e+00> : vector<128xf32>
    %38 = vector.multi_reduction <add>, %37, %cst_16 [0] : vector<8x128xf32> to vector<128xf32>
    %39 = vector.shape_cast %38 : vector<128xf32> to vector<1x128xf32>
    %cst_17 = arith.constant 8.000000e+00 : f32
    %40 = vector.broadcast %cst_17 : f32 to vector<1x128xf32>
    %41 = arith.divf %39, %40 : vector<1x128xf32>
    %cst_18 = arith.constant 9.99999974E-6 : f32
    %42 = vector.broadcast %cst_18 : f32 to vector<1x128xf32>
    %43 = arith.addf %41, %42 : vector<1x128xf32>
    %44 = math.rsqrt %43 : vector<1x128xf32>
    %45 = arith.mulf %4, %44 : vector<1x128xf32>
    %46 = vector.broadcast %45 : vector<1x128xf32> to vector<8x128xf32>
    %47 = arith.mulf %36, %46 : vector<8x128xf32>
    %48 = vector.broadcast %5 : vector<1x128xf32> to vector<8x128xf32>
    %49 = arith.addf %47, %48 : vector<8x128xf32>
    %cst_19 = arith.constant 0.000000e+00 : f32
    %50 = vector.broadcast %cst_19 : f32 to vector<8x128xf32>
    %51 = arith.maximumf %49, %50 : vector<8x128xf32>
    %52 = arith.addf %51, %0 : vector<8x128xf32>
    %c0_20 = arith.constant 0 : index
    %c0_21 = arith.constant 0 : index
    %53 = vector.load %arg4[%c0_20, %c0_21] : memref<8x128xf32, #tpu.memory_space<vmem>>, vector<8x128xf32>
    tpu.vector_store %arg4[%c0_20, %c0_21], %52 {strides = array<i32>} : memref<8x128xf32, #tpu.memory_space<vmem>>, vector<8x128xf32>,
    return
  }
}

</mosaic_0001>

<llo_original>
// kernel: tpu_custom_call.1
$region0: #{tpu_custom_call.1}
  #allocation0 [shape = 'u32[]', space=smem, size = 0x4, offset = 0x4, fixed_abs, tag = 'smem constant byte address 0x4 - core index']
  #allocation1 [shape = 'u32[72,128]{1,0:T(1,128)}', space=vmem, size = 0x9000, scoped, tag = 'internal scratch']
  %s0 = inlined_call_operand.hbm [shape: f32[8,128], index: 0, kind: input, shape index: {}]
  %s1 = inlined_call_operand.hbm [shape: f32[128,128], index: 1, kind: input, shape index: {}]
  %s2 = inlined_call_operand.hbm [shape: f32[128,128], index: 2, kind: input, shape index: {}]
  %s3 = inlined_call_operand.hbm [shape: f32[8,128], index: 3, kind: input, shape index: {}]
  %s4 = inlined_call_operand.hbm [shape: f32[8,128], index: 4, kind: output, shape index: {}]
  %s5 = sld [smem:[#allocation0]]
  $region42: #{tpu_custom_call.1} parent=0
    _
  %s7 = ssub.s32 1, %s5
  %s8 = scalar_select 0, %s7, %s5
  $region1: #{tpu_custom_call.1} parent=0
    #allocation2 [shape = 'u8[4096]{0}', space=vmem, size = 0x1000, scoped, tag = 'input window, operand 0, single buffered']
    #allocation3 [shape = 's32[1]{0}', space=sflag, size = 0x4, scoped, tag = 'scoped memory for tpu_custom_call.1']
    #allocation4 [shape = 's32[1]{0}', space=sflag, size = 0x4, scoped, tag = 'scoped memory for tpu_custom_call.1']
    #allocation5 [shape = 'u8[65536]{0}', space=vmem, size = 0x10000, scoped, tag = 'input window, operand 1, single buffered']
    #allocation6 [shape = 's32[1]{0}', space=sflag, size = 0x4, scoped, tag = 'scoped memory for tpu_custom_call.1']
    #allocation7 [shape = 'u8[65536]{0}', space=vmem, size = 0x10000, scoped, tag = 'input window, operand 2, single buffered']
    #allocation8 [shape = 'u8[4096]{0}', space=vmem, size = 0x1000, scoped, tag = 'input window, operand 3, single buffered']
    #allocation9 [shape = 's32[1]{0}', space=sflag, size = 0x4, scoped, tag = 'scoped memory for tpu_custom_call.1']
    #allocation10 [shape = 'u8[4096]{0}', space=vmem, size = 0x1000, scoped, tag = 'output window, operand 0, single buffered']
    %9 = vsyncpa [#allocation3], 0
    %10 = vsyncpa [#allocation6], 0
    %11 = vsyncpa [#allocation9], 0
    %12 = vsyncpa [#allocation4], 0
    // Predicated region
    $region2: #{tpu_custom_call.1} parent=1 // pred_check
      _
    $region3: #{tpu_custom_call.1} parent=1 // pred_check_branch
      %14 = sbr.rel (0) target = $region5
    $region4: #{tpu_custom_call.1} parent=1 // pred_region
      %16 = vsyncadd [#allocation3], 0
      %s18 = sshll.u32 %s0, 4
      %s19 = int_to_ptr.hbm [resolvable:$true] %s18
      %s20 = sshll.u32 [#allocation2], 4
      %s21 = int_to_ptr.vmem [resolvable:$true] %s20
      %23 = dma.hbm_to_vmem [thread:$0]  %s19, 128, %s21, [#allocation3]
    $region5: #{tpu_custom_call.1} parent=1 // pred_fallthru
      _
    // Predicated region
    $region6: #{tpu_custom_call.1} parent=1 // pred_check
      _
    $region7: #{tpu_custom_call.1} parent=1 // pred_check_branch
      %25 = sbr.rel (0) target = $region9
    $region8: #{tpu_custom_call.1} parent=1 // pred_region
      %27 = vsyncadd [#allocation6], 0
      %s28 = sshll.u32 %s1, 4
      %s29 = int_to_ptr.hbm [resolvable:$true] %s28
      %s30 = sshll.u32 [#allocation5], 4
      %s31 = int_to_ptr.vmem [resolvable:$true] %s30
      %36 = dma.hbm_to_vmem [thread:$0]  %s29, 2048, %s31, [#allocation6], 128, 128, 8
    $region9: #{tpu_custom_call.1} parent=1 // pred_fallthru
      _
    // Predicated region
    $region10: #{tpu_custom_call.1} parent=1 // pred_check
      _
    $region11: #{tpu_custom_call.1} parent=1 // pred_check_branch
      %38 = sbr.rel (0) target = $region13
    $region12: #{tpu_custom_call.1} parent=1 // pred_region
      %40 = vsyncadd [#allocation6], 0
      %s41 = sshll.u32 %s2, 4
      %s42 = int_to_ptr.hbm [resolvable:$true] %s41
      %s43 = sshll.u32 [#allocation7], 4
      %s44 = int_to_ptr.vmem [resolvable:$true] %s43
      %49 = dma.hbm_to_vmem [thread:$0]  %s42, 2048, %s44, [#allocation6], 128, 128, 8
    $region13: #{tpu_custom_call.1} parent=1 // pred_fallthru
      _
    // Predicated region
    $region14: #{tpu_custom_call.1} parent=1 // pred_check
      _
    $region15: #{tpu_custom_call.1} parent=1 // pred_check_branch
      %51 = sbr.rel (0) target = $region17
    $region16: #{tpu_custom_call.1} parent=1 // pred_region
      %53 = vsyncadd [#allocation9], 0
      %s55 = sshll.u32 %s3, 4
      %s56 = int_to_ptr.hbm [resolvable:$true] %s55
      %s57 = sshll.u32 [#allocation8], 4
      %s58 = int_to_ptr.vmem [resolvable:$true] %s57
      %60 = dma.hbm_to_vmem [thread:$0]  %s56, 128, %s58, [#allocation9]
    $region17: #{tpu_custom_call.1} parent=1 // pred_fallthru
      _
    // Predicated region
    $region18: #{tpu_custom_call.1} parent=1 // pred_check
      _
    $region19: #{tpu_custom_call.1} parent=1 // pred_check_branch
      %62 = sbr.rel (0) target = $region21
    $region20: #{tpu_custom_call.1} parent=1 // pred_region
      %64 = dma.done [#allocation3], 128
    $region21: #{tpu_custom_call.1} parent=1 // pred_fallthru
      _
    // Predicated region
    $region22: #{tpu_custom_call.1} parent=1 // pred_check
      _
    $region23: #{tpu_custom_call.1} parent=1 // pred_check_branch
      %66 = sbr.rel (0) target = $region25
    $region24: #{tpu_custom_call.1} parent=1 // pred_region
      %68 = dma.done [#allocation6], 2048
    $region25: #{tpu_custom_call.1} parent=1 // pred_fallthru
      _
    // Predicated region
    $region26: #{tpu_custom_call.1} parent=1 // pred_check
      _
    $region27: #{tpu_custom_call.1} parent=1 // pred_check_branch
      %70 = sbr.rel (0) target = $region29
    $region28: #{tpu_custom_call.1} parent=1 // pred_region
      %72 = dma.done [#allocation6], 2048
    $region29: #{tpu_custom_call.1} parent=1 // pred_fallthru
      _
    // Predicated region
    $region30: #{tpu_custom_call.1} parent=1 // pred_check
      _
    $region31: #{tpu_custom_call.1} parent=1 // pred_check_branch
      %74 = sbr.rel (0) target = $region33
    $region32: #{tpu_custom_call.1} parent=1 // pred_region
      %76 = dma.done [#allocation9], 128
    $region33: #{tpu_custom_call.1} parent=1 // pred_fallthru
      _
    %v77 = vld [vmem:[#allocation2] sm:$0xff]
    %v78 = vld [vmem:[#allocation8] sm:$0xff]
    %v79 = vld [vmem:[#allocation5] sm:$0xff]
    %v80 = vld [vmem:[#allocation5 + $0x8] sm:$0xff]
    %v81 = vld [vmem:[#allocation5 + $0x10] sm:$0xff]
    %v82 = vld [vmem:[#allocation5 + $0x18] sm:$0xff]
    %v83 = vld [vmem:[#allocation5 + $0x20] sm:$0xff]
    %v84 = vld [vmem:[#allocation5 + $0x28] sm:$0xff]
    %v85 = vld [vmem:[#allocation5 + $0x30] sm:$0xff]
    %v86 = vld [vmem:[#allocation5 + $0x38] sm:$0xff]
    %v87 = vld [vmem:[#allocation5 + $0x40] sm:$0xff]
    %v88 = vld [vmem:[#allocation5 + $0x48] sm:$0xff]
    %v89 = vld [vmem:[#allocation5 + $0x50] sm:$0xff]
    %v90 = vld [vmem:[#allocation5 + $0x58] sm:$0xff]
    %v91 = vld [vmem:[#allocation5 + $0x60] sm:$0xff]
    %v92 = vld [vmem:[#allocation5 + $0x68] sm:$0xff]
    %v93 = vld [vmem:[#allocation5 + $0x70] sm:$0xff]
    %v94 = vld [vmem:[#allocation5 + $0x78] sm:$0xff]
    %95 = vmatpush.msra.mxu0 %v94
    %96 = vmatpush.msra.mxu0 %v93
    %97 = vmatpush.msra.mxu0 %v92
    %98 = vmatpush.msra.mxu0 %v91
    %99 = vmatpush.msra.mxu0 %v90
    %100 = vmatpush.msra.mxu0 %v89
    %101 = vmatpush.msra.mxu0 %v88
    %102 = vmatpush.msra.mxu0 %v87
    %103 = vmatpush.msra.mxu0 %v86
    %104 = vmatpush.msra.mxu0 %v85
    %105 = vmatpush.msra.mxu0 %v84
    %106 = vmatpush.msra.mxu0 %v83
    %107 = vmatpush.msra.mxu0 %v82
    %108 = vmatpush.msra.mxu0 %v81
    %109 = vmatpush.msra.mxu0 %v80
    %110 = vmatpush.msra.mxu0 %v79
    %111 = vmatmul.f32.gmra.mxu0 %v77
    %v112 = vpop.f32.mrf.mxu0
    %v113 = vadd.f32 0.0, %v112
    %114 = vdwg.mxu0
    %v115 = vrot.slane %v113, 4
    %v116 = vadd.f32 %v113, %v115
    %v117 = vrot.slane %v116, 2
    %v118 = vadd.f32 %v116, %v117
    %v119 = vrot.slane %v118, 1
    %v120 = vadd.f32 %v118, %v119
    %v121 = vrcp.pop 8.0
    %v122 = vmul.f32 8.0, %v121
    %v123 = vsub.f32 1.0, %v122
    %v124 = vmul.f32 %v121, %v123
    %v125 = vadd.f32 %v121, %v124
    %vm126 = vweird.f32 %v121
    %v127 = vsel %vm126, %v121, %v125
    %v128 = vmul.f32 %v120, %v127
    %v129 = vsub.f32 %v113, %v128
    %v130 = vmul.f32 %v129, %v129
    %v131 = vrot.slane %v130, 4
    %v132 = vadd.f32 %v130, %v131
    %v133 = vrot.slane %v132, 2
    %v134 = vadd.f32 %v132, %v133
    %v135 = vrot.slane %v134, 1
    %v136 = vadd.f32 %v134, %v135
    %v137 = vmul.f32 %v136, %v127
    %v138 = vadd.f32 %v137, 1e-05
    %v139 = vrsqrt.pop %v138
    %v140 = vmul.f32 %v139, %v138
    %v141 = vmul.f32 %v140, %v139
    %v142 = vmul.f32 0.5, %v141
    %v143 = vsub.f32 1.5, %v142
    %v144 = vmul.f32 %v139, %v143
    %vm145 = vweird.f32 %v138
    %vm146 = vweird.f32 %v139
    %vm147 = vmor %vm145, %vm146
    %v148 = vsel %vm147, %v139, %v144
    %v149 = vmul.f32 %v78, %v148
    %v150 = vperm.slane %v149, 0
    %v151 = vmul.f32 %v129, %v150
    %v152 = vperm.slane %v78, 1
    %v153 = vadd.f32 %v151, %v152
    %v154 = vmax.f32 %v153, 0.0
    %v155 = vld [vmem:[#allocation7] sm:$0xff]
    %v156 = vld [vmem:[#allocation7 + $0x8] sm:$0xff]
    %v157 = vld [vmem:[#allocation7 + $0x10] sm:$0xff]
    %v158 = vld [vmem:[#allocation7 + $0x18] sm:$0xff]
    %v159 = vld [vmem:[#allocation7 + $0x20] sm:$0xff]
    %v160 = vld [vmem:[#allocation7 + $0x28] sm:$0xff]
    %v161 = vld [vmem:[#allocation7 + $0x30] sm:$0xff]
    %v162 = vld [vmem:[#allocation7 + $0x38] sm:$0xff]
    %v163 = vld [vmem:[#allocation7 + $0x40] sm:$0xff]
    %v164 = vld [vmem:[#allocation7 + $0x48] sm:$0xff]
    %v165 = vld [vmem:[#allocation7 + $0x50] sm:$0xff]
    %v166 = vld [vmem:[#allocation7 + $0x58] sm:$0xff]
    %v167 = vld [vmem:[#allocation7 + $0x60] sm:$0xff]
    %v168 = vld [vmem:[#allocation7 + $0x68] sm:$0xff]
    %v169 = vld [vmem:[#allocation7 + $0x70] sm:$0xff]
    %v170 = vld [vmem:[#allocation7 + $0x78] sm:$0xff]
    %171 = vmatpush.msra.mxu0 %v170
    %172 = vmatpush.msra.mxu0 %v169
    %173 = vmatpush.msra.mxu0 %v168
    %174 = vmatpush.msra.mxu0 %v167
    %175 = vmatpush.msra.mxu0 %v166
    %176 = vmatpush.msra.mxu0 %v165
    %177 = vmatpush.msra.mxu0 %v164
    %178 = vmatpush.msra.mxu0 %v163
    %179 = vmatpush.msra.mxu0 %v162
    %180 = vmatpush.msra.mxu0 %v161
    %181 = vmatpush.msra.mxu0 %v160
    %182 = vmatpush.msra.mxu0 %v159
    %183 = vmatpush.msra.mxu0 %v158
    %184 = vmatpush.msra.mxu0 %v157
    %185 = vmatpush.msra.mxu0 %v156
    %186 = vmatpush.msra.mxu0 %v155
    %187 = vmatmul.f32.gmra.mxu0 %v154
    %v188 = vpop.f32.mrf.mxu0
    %v189 = vadd.f32 0.0, %v188
    %190 = vdwg.mxu0
    %v191 = vrot.slane %v189, 4
    %v192 = vadd.f32 %v189, %v191
    %v193 = vrot.slane %v192, 2
    %v194 = vadd.f32 %v192, %v193
    %v195 = vrot.slane %v194, 1
    %v196 = vadd.f32 %v194, %v195
    %v197 = vmul.f32 %v196, %v127
    %v198 = vsub.f32 %v189, %v197
    %v199 = vmul.f32 %v198, %v198
    %v200 = vrot.slane %v199, 4
    %v201 = vadd.f32 %v199, %v200
    %v202 = vrot.slane %v201, 2
    %v203 = vadd.f32 %v201, %v202
    %v204 = vrot.slane %v203, 1
    %v205 = vadd.f32 %v203, %v204
    %v206 = vmul.f32 %v205, %v127
    %v207 = vadd.f32 %v206, 1e-05
    %v208 = vrsqrt.pop %v207
    %v209 = vmul.f32 %v208, %v207
    %v210 = vmul.f32 %v209, %v208
    %v211 = vmul.f32 0.5, %v210
    %v212 = vsub.f32 1.5, %v211
    %v213 = vmul.f32 %v208, %v212
    %vm214 = vweird.f32 %v207
    %vm215 = vweird.f32 %v208
    %vm216 = vmor %vm214, %vm215
    %v217 = vsel %vm216, %v208, %v213
    %v218 = vmul.f32 %v78, %v217
    %v219 = vperm.slane %v218, 2
    %v220 = vmul.f32 %v198, %v219
    %v221 = vperm.slane %v78, 3
    %v222 = vadd.f32 %v220, %v221
    %v223 = vmax.f32 %v222, 0.0
    %v224 = vadd.f32 %v223, %v77
    %225 = vst [vmem:[#allocation10] sm:$0xff] %v224
    // Predicated region
    $region34: #{tpu_custom_call.1} parent=1 // pred_check
      _
    $region35: #{tpu_custom_call.1} parent=1 // pred_check_branch
      %227 = sbr.rel (0) target = $region37
    $region36: #{tpu_custom_call.1} parent=1 // pred_region
      %229 = vsyncadd [#allocation4], 0
      %s231 = sshll.u32 [#allocation10], 4
      %s232 = int_to_ptr.vmem [resolvable:$true] %s231
      %s233 = sshll.u32 %s4, 4
      %s234 = int_to_ptr.hbm [resolvable:$true] %s233
      %236 = dma.vmem_to_hbm [thread:$0]  %s232, 128, %s234, [#allocation4]
    $region37: #{tpu_custom_call.1} parent=1 // pred_fallthru
      _
    // Predicated region
    $region38: #{tpu_custom_call.1} parent=1 // pred_check
      _
    $region39: #{tpu_custom_call.1} parent=1 // pred_check_branch
      %238 = sbr.rel (0) target = $region41
    $region40: #{tpu_custom_call.1} parent=1 // pred_region
      %240 = dma.done [#allocation4], 128
    $region41: #{tpu_custom_call.1} parent=1 // pred_fallthru
      _
    %241 = vsyncpa [#allocation3], 1
    %242 = vsyncpa [#allocation6], 1
    %243 = vsyncpa [#allocation9], 1
    %244 = vsyncpa [#allocation4], 1

</llo_original>
